<compile_context>
chip_gen: v7x
topology: tpu7x:2x2x1
jax: 0.10.0
libtpu: 0.0.40
codegen_flags: <defaults>
</compile_context>

<pallas_src>
import jax
import jax.numpy as jnp
from jax.experimental import pallas as pl
from jax.experimental.pallas import tpu as pltpu


def _make_mlp_kernel(out_dim, tm, ch):
    """Kernel for a given (static) output width, tile rows tm, chunk rows ch.

    Packed-weight layout (flat f32 SMEM vector, row-major):
      w1[2,4] -> [0:8)      b1[4] -> [8:12)
      w2[4,2] -> [12:20)    b2[2] -> [20:22)
      0.5*w3[2,o] -> [22:22+2o)   0.5*b3[o] -> [22+2o:22+3o)
    (w3/b3 are pre-scaled by 0.5 for the tanh-form sigmoid.)
    """
    W1, B1, W2, B2 = 0, 8, 12, 20
    W3, B3 = 22, 22 + 2 * out_dim
    n_chunks = tm // ch

    def kernel(w_ref, p1_ref, p2_ref, o_ref):
        # Hoist all weight scalars out of the chunk loop: one SMEM read each per
        # grid step instead of per chunk.
        w1 = [w_ref[W1 + k] for k in range(8)]
        b1 = [w_ref[B1 + k] for k in range(4)]
        w2 = [w_ref[W2 + k] for k in range(8)]
        b2 = [w_ref[B2 + k] for k in range(2)]
        w3 = [w_ref[W3 + k] for k in range(2 * out_dim)]   # already *0.5
        b3 = [w_ref[B3 + k] for k in range(out_dim)]       # already *0.5

        @pl.loop(0, n_chunks)
        def _(c):
            r0 = pl.multiple_of(c * ch, ch)
            a = p1_ref[pl.ds(r0, ch), :].astype(jnp.float32)   # (ch, L)
            b = p2_ref[pl.ds(r0, ch), :].astype(jnp.float32)   # (ch, L)

            # Linear(2->4)+ReLU fused with the Linear(4->2) accumulation so the
            # four hidden units are never all live at once (stays in vregs).
            acc0 = jnp.full_like(a, b2[0])
            acc1 = jnp.full_like(a, b2[1])
            for i in range(4):
                h = jnp.maximum(a * w1[i] + b * w1[4 + i] + b1[i], 0.0)
                acc0 = acc0 + h * w2[2 * i + 0]
                acc1 = acc1 + h * w2[2 * i + 1]
            h2_0 = jnp.maximum(acc0, 0.0)
            h2_1 = jnp.maximum(acc1, 0.0)

            # Linear(2 -> out) + Sigmoid.  With w3/b3 pre-scaled by 0.5:
            #   sigmoid(z) == 0.5 * tanh(0.5*z) + 0.5   (tanh runs on the EUP).
            # TODO(synk): optional bf16 hidden math (2x VALU throughput on
            # v6e/v7x) not enabled — would exceed the 1e-5 reference tolerance.
            for j in range(out_dim):
                zh = h2_0 * w3[j] + h2_1 * w3[out_dim + j] + b3[j]
                o_ref[j, pl.ds(r0, ch), :] = 0.5 * jnp.tanh(zh) + 0.5

    return kernel


def epitope_mhc_mlp_forward(p1, p2, params, *, lanes=1024, rows_per_tile=512):
    """Pallas implementation of EpitopeMHCMLP.forward.

    p1, p2 : arrays with the same number of elements N (any shape; flattened
             like torch's .view(-1, 1)).  bf16 inputs are kept bf16 for the DMA
             and upcast in-kernel; everything else is cast to f32.
    params : dict with w1 (2,4), b1 (1,4), w2 (4,2), b2 (1,2), w3 (2,out), b3 (1,out).
    Returns squeeze(sigmoid(mlp(concat(p1, p2)))), i.e. shape (N,) for out_dim=1.
    """
    def prep(x):
        x = jnp.ravel(x)
        if x.dtype != jnp.bfloat16 and x.dtype != jnp.float32:
            x = x.astype(jnp.float32)
        return x

    x1, x2 = prep(p1), prep(p2)
    n = x1.shape[0]
    assert x2.shape[0] == n, "p1 and p2 must have the same number of elements"

    w1, b1 = params["w1"], params["b1"]
    w2, b2 = params["w2"], params["b2"]
    w3, b3 = params["w3"], params["b3"]
    out_dim = w3.shape[1]

    # Lane-dense geometry: samples as (rows, L), rows rounded only to the 8-row
    # sublane granularity (NOT to the tile size -> minimal padding; zero padding
    # for L*8-aligned N).
    L = lanes
    CH = 8                                           # in-kernel row chunk (vreg group)
    rows = max(8, ((pl.cdiv(n, L) + 7) // 8) * 8)
    n_pad = rows * L
    if n_pad != n:
        x1 = jnp.pad(x1, (0, n_pad - n))
        x2 = jnp.pad(x2, (0, n_pad - n))
    x1 = x1.reshape(rows, L)
    x2 = x2.reshape(rows, L)

    rows_per_tile = max(CH, (rows_per_tile // CH) * CH)
    tm = min(rows_per_tile, rows)
    if rows >= 2 * CH:
        # Ensure >=2 grid steps so both v7x TensorCores get work.
        tm = min(tm, ((rows // 2 + CH - 1) // CH) * CH)
    grid = pl.cdiv(rows, tm)                         # last tile may be partial

    # Pack all weight scalars into one small SMEM vector; fold the 0.5 of the
    # tanh-form sigmoid into w3/b3 (saves one VALU mul per output per sample).
    wvec = jnp.concatenate([
        w1.reshape(-1), b1.reshape(-1),
        w2.reshape(-1), b2.reshape(-1),
        0.5 * w3.reshape(-1), 0.5 * b3.reshape(-1),
    ]).astype(jnp.float32)

    out = pl.pallas_call(
        _make_mlp_kernel(out_dim, tm, CH),
        out_shape=jax.ShapeDtypeStruct((out_dim, rows, L), jnp.float32),
        grid_spec=pltpu.PrefetchScalarGridSpec(
            num_scalar_prefetch=1,                   # packed weights -> SMEM once
            grid=(grid,),
            in_specs=[
                pl.BlockSpec((tm, L), lambda i, w: (i, 0)),      # p1 slab tile
                pl.BlockSpec((tm, L), lambda i, w: (i, 0)),      # p2 slab tile
            ],
            out_specs=pl.BlockSpec((out_dim, tm, L), lambda i, w: (0, i, 0)),
        ),
        compiler_params=pltpu.CompilerParams(
            dimension_semantics=("parallel",),       # shard row tiles across TCs
            vmem_limit_bytes=48 * 1024 * 1024,       # headroom on v7x's 64 MiB
        ),
    )(wvec, x1, x2)

    out = out.reshape(out_dim, n_pad)[:, :n]         # drop padding -> (out_dim, N)
    if out_dim == 1:
        return jnp.squeeze(out)                      # (N,) — no transpose needed
    # TODO(synk): for out_dim > 1 keep (out_dim, N) downstream if possible; the
    # transpose below is an extra HBM pass only done to match the PyTorch layout.
    return jnp.squeeze(jnp.transpose(out))


def init_params(key, input_dim=2, output_dim=1):
    """PyTorch-Linear-style uniform init (bound = 1/sqrt(fan_in))."""
    dims = [(input_dim, 4), (4, 2), (2, output_dim)]
    params = {}
    for idx, (fan_in, fan_out) in enumerate(dims, start=1):
        key, kw, kb = jax.random.split(key, 3)
        bound = 1.0 / jnp.sqrt(fan_in)
        params[f"w{idx}"] = jax.random.uniform(
            kw, (fan_in, fan_out), jnp.float32, -bound, bound)
        params[f"b{idx}"] = jax.random.uniform(
            kb, (1, fan_out), jnp.float32, -bound, bound)
    return params


def _reference(p1, p2, params):
    x = jnp.concatenate(
        (p1.reshape(-1, 1), p2.reshape(-1, 1)), axis=1).astype(jnp.float32)
    h = jnp.maximum(x @ params["w1"] + params["b1"], 0.0)
    h = jnp.maximum(h @ params["w2"] + params["b2"], 0.0)
    z = h @ params["w3"] + params["b3"]
    return jnp.squeeze(jax.nn.sigmoid(z))


if __name__ == "__main__":
    key = jax.random.PRNGKey(0)
    k_params, k_p1, k_p2 = jax.random.split(key, 3)

    params = init_params(k_params, input_dim=2, output_dim=1)

    # Small shape consistent with the module: 32 per-sample scalars.
    p1 = jax.random.normal(k_p1, (32,), jnp.float32)
    p2 = jax.random.normal(k_p2, (32,), jnp.float32)
    out = jax.block_until_ready(epitope_mhc_mlp_forward(p1, p2, params))
    ref = _reference(p1, p2, params)
    assert out.shape == ref.shape == (32,)
    assert jnp.allclose(out, ref, atol=1e-5, rtol=1e-5)

    # N not a multiple of the lane slab (exercises minimal-padding path).
    k1, k2 = jax.random.split(k_p1)
    q1 = jax.random.normal(k1, (300,), jnp.float32)
    q2 = jax.random.normal(k2, (300,), jnp.float32)
    out2 = jax.block_until_ready(epitope_mhc_mlp_forward(q1, q2, params))
    ref2 = _reference(q1, q2, params)
    assert out2.shape == ref2.shape == (300,)
    assert jnp.allclose(out2, ref2, atol=1e-5, rtol=1e-5)

    # Larger unaligned N: exercises >=2 grid steps, a partial last tile, and the
    # in-kernel chunk loop with several iterations.
    k3, k4 = jax.random.split(k_p2)
    r1 = jax.random.normal(k3, (33 * 1024 + 5,), jnp.float32)
    r2 = jax.random.normal(k4, (33 * 1024 + 5,), jnp.float32)
    out3 = jax.block_until_ready(epitope_mhc_mlp_forward(r1, r2, params))
    ref3 = _reference(r1, r2, params)
    assert out3.shape == ref3.shape == (33 * 1024 + 5,)
    assert jnp.allclose(out3, ref3, atol=1e-5, rtol=1e-5)

    print("KERNEL_OK")
</pallas_src>

<mosaic_0001>
module attributes {stable_mosaic.version = 11 : i64} {
  func.func @kernel(%arg0: i32, %arg1: memref<25xf32, #tpu.memory_space<smem>>, %arg2: memref<8x1024xf32, #tpu.memory_space<vmem>>, %arg3: memref<8x1024xf32, #tpu.memory_space<vmem>>, %arg4: memref<1x8x1024xf32, #tpu.memory_space<vmem>>) attributes {dimension_semantics = [#tpu.dimension_semantics<parallel>], iteration_bounds = array<i64: 1>, scalar_prefetch = 1 : i64, scratch_operands = 0 : i64, tpu.core_type = #tpu.core_type<tc>, window_params = [{transform_indices = @transform_0, window_bounds = array<i64: 8, 1024>}, {transform_indices = @transform_1, window_bounds = array<i64: 8, 1024>}, {transform_indices = @transform_2, window_bounds = array<i64: 1, 8, 1024>}]} {
    %c0 = arith.constant 0 : index
    %0 = memref.load %arg1[%c0] : memref<25xf32, #tpu.memory_space<smem>>
    %c1 = arith.constant 1 : index
    %1 = memref.load %arg1[%c1] : memref<25xf32, #tpu.memory_space<smem>>
    %c2 = arith.constant 2 : index
    %2 = memref.load %arg1[%c2] : memref<25xf32, #tpu.memory_space<smem>>
    %c3 = arith.constant 3 : index
    %3 = memref.load %arg1[%c3] : memref<25xf32, #tpu.memory_space<smem>>
    %c4 = arith.constant 4 : index
    %4 = memref.load %arg1[%c4] : memref<25xf32, #tpu.memory_space<smem>>
    %c5 = arith.constant 5 : index
    %5 = memref.load %arg1[%c5] : memref<25xf32, #tpu.memory_space<smem>>
    %c6 = arith.constant 6 : index
    %6 = memref.load %arg1[%c6] : memref<25xf32, #tpu.memory_space<smem>>
    %c7 = arith.constant 7 : index
    %7 = memref.load %arg1[%c7] : memref<25xf32, #tpu.memory_space<smem>>
    %c8 = arith.constant 8 : index
    %8 = memref.load %arg1[%c8] : memref<25xf32, #tpu.memory_space<smem>>
    %c9 = arith.constant 9 : index
    %9 = memref.load %arg1[%c9] : memref<25xf32, #tpu.memory_space<smem>>
    %c10 = arith.constant 10 : index
    %10 = memref.load %arg1[%c10] : memref<25xf32, #tpu.memory_space<smem>>
    %c11 = arith.constant 11 : index
    %11 = memref.load %arg1[%c11] : memref<25xf32, #tpu.memory_space<smem>>
    %c12 = arith.constant 12 : index
    %12 = memref.load %arg1[%c12] : memref<25xf32, #tpu.memory_space<smem>>
    %c13 = arith.constant 13 : index
    %13 = memref.load %arg1[%c13] : memref<25xf32, #tpu.memory_space<smem>>
    %c14 = arith.constant 14 : index
    %14 = memref.load %arg1[%c14] : memref<25xf32, #tpu.memory_space<smem>>
    %c15 = arith.constant 15 : index
    %15 = memref.load %arg1[%c15] : memref<25xf32, #tpu.memory_space<smem>>
    %c16 = arith.constant 16 : index
    %16 = memref.load %arg1[%c16] : memref<25xf32, #tpu.memory_space<smem>>
    %c17 = arith.constant 17 : index
    %17 = memref.load %arg1[%c17] : memref<25xf32, #tpu.memory_space<smem>>
    %c18 = arith.constant 18 : index
    %18 = memref.load %arg1[%c18] : memref<25xf32, #tpu.memory_space<smem>>
    %c19 = arith.constant 19 : index
    %19 = memref.load %arg1[%c19] : memref<25xf32, #tpu.memory_space<smem>>
    %c20 = arith.constant 20 : index
    %20 = memref.load %arg1[%c20] : memref<25xf32, #tpu.memory_space<smem>>
    %c21 = arith.constant 21 : index
    %21 = memref.load %arg1[%c21] : memref<25xf32, #tpu.memory_space<smem>>
    %c22 = arith.constant 22 : index
    %22 = memref.load %arg1[%c22] : memref<25xf32, #tpu.memory_space<smem>>
    %c23 = arith.constant 23 : index
    %23 = memref.load %arg1[%c23] : memref<25xf32, #tpu.memory_space<smem>>
    %c24 = arith.constant 24 : index
    %24 = memref.load %arg1[%c24] : memref<25xf32, #tpu.memory_space<smem>>
    %c0_i32 = arith.constant 0 : i32
    %c1_i32 = arith.constant 1 : i32
    %25 = arith.muli %c0_i32, %c1_i32 : i32
    %c0_i32_0 = arith.constant 0 : i32
    %26 = arith.addi %c0_i32_0, %25 : i32
    %c8_i32 = arith.constant 8 : i32
    %27 = arith.muli %26, %c8_i32 : i32
    %28 = tpu.assume_multiple %27, 8 : i32
    %29 = arith.index_cast %28 : i32 to index
    %c0_1 = arith.constant 0 : index
    %30 = vector.load %arg2[%29, %c0_1] : memref<8x1024xf32, #tpu.memory_space<vmem>>, vector<8x1024xf32>
    %31 = arith.index_cast %28 : i32 to index
    %c0_2 = arith.constant 0 : index
    %32 = vector.load %arg3[%31, %c0_2] : memref<8x1024xf32, #tpu.memory_space<vmem>>, vector<8x1024xf32>
    %33 = vector.broadcast %20 : f32 to vector<8x1024xf32>
    %34 = vector.broadcast %21 : f32 to vector<8x1024xf32>
    %35 = vector.broadcast %0 : f32 to vector<8x1024xf32>
    %36 = arith.mulf %30, %35 : vector<8x1024xf32>
    %37 = vector.broadcast %4 : f32 to vector<8x1024xf32>
    %38 = arith.mulf %32, %37 : vector<8x1024xf32>
    %39 = arith.addf %36, %38 : vector<8x1024xf32>
    %40 = vector.broadcast %8 : f32 to vector<8x1024xf32>
    %41 = arith.addf %39, %40 : vector<8x1024xf32>
    %cst = arith.constant 0.000000e+00 : f32
    %42 = vector.broadcast %cst : f32 to vector<8x1024xf32>
    %43 = arith.maximumf %41, %42 : vector<8x1024xf32>
    %44 = vector.broadcast %12 : f32 to vector<8x1024xf32>
    %45 = arith.mulf %43, %44 : vector<8x1024xf32>
    %46 = arith.addf %33, %45 : vector<8x1024xf32>
    %47 = vector.broadcast %13 : f32 to vector<8x1024xf32>
    %48 = arith.mulf %43, %47 : vector<8x1024xf32>
    %49 = arith.addf %34, %48 : vector<8x1024xf32>
    %50 = vector.broadcast %1 : f32 to vector<8x1024xf32>
    %51 = arith.mulf %30, %50 : vector<8x1024xf32>
    %52 = vector.broadcast %5 : f32 to vector<8x1024xf32>
    %53 = arith.mulf %32, %52 : vector<8x1024xf32>
    %54 = arith.addf %51, %53 : vector<8x1024xf32>
    %55 = vector.broadcast %9 : f32 to vector<8x1024xf32>
    %56 = arith.addf %54, %55 : vector<8x1024xf32>
    %cst_3 = arith.constant 0.000000e+00 : f32
    %57 = vector.broadcast %cst_3 : f32 to vector<8x1024xf32>
    %58 = arith.maximumf %56, %57 : vector<8x1024xf32>
    %59 = vector.broadcast %14 : f32 to vector<8x1024xf32>
    %60 = arith.mulf %58, %59 : vector<8x1024xf32>
    %61 = arith.addf %46, %60 : vector<8x1024xf32>
    %62 = vector.broadcast %15 : f32 to vector<8x1024xf32>
    %63 = arith.mulf %58, %62 : vector<8x1024xf32>
    %64 = arith.addf %49, %63 : vector<8x1024xf32>
    %65 = vector.broadcast %2 : f32 to vector<8x1024xf32>
    %66 = arith.mulf %30, %65 : vector<8x1024xf32>
    %67 = vector.broadcast %6 : f32 to vector<8x1024xf32>
    %68 = arith.mulf %32, %67 : vector<8x1024xf32>
    %69 = arith.addf %66, %68 : vector<8x1024xf32>
    %70 = vector.broadcast %10 : f32 to vector<8x1024xf32>
    %71 = arith.addf %69, %70 : vector<8x1024xf32>
    %cst_4 = arith.constant 0.000000e+00 : f32
    %72 = vector.broadcast %cst_4 : f32 to vector<8x1024xf32>
    %73 = arith.maximumf %71, %72 : vector<8x1024xf32>
    %74 = vector.broadcast %16 : f32 to vector<8x1024xf32>
    %75 = arith.mulf %73, %74 : vector<8x1024xf32>
    %76 = arith.addf %61, %75 : vector<8x1024xf32>
    %77 = vector.broadcast %17 : f32 to vector<8x1024xf32>
    %78 = arith.mulf %73, %77 : vector<8x1024xf32>
    %79 = arith.addf %64, %78 : vector<8x1024xf32>
    %80 = vector.broadcast %3 : f32 to vector<8x1024xf32>
    %81 = arith.mulf %30, %80 : vector<8x1024xf32>
    %82 = vector.broadcast %7 : f32 to vector<8x1024xf32>
    %83 = arith.mulf %32, %82 : vector<8x1024xf32>
    %84 = arith.addf %81, %83 : vector<8x1024xf32>
    %85 = vector.broadcast %11 : f32 to vector<8x1024xf32>
    %86 = arith.addf %84, %85 : vector<8x1024xf32>
    %cst_5 = arith.constant 0.000000e+00 : f32
    %87 = vector.broadcast %cst_5 : f32 to vector<8x1024xf32>
    %88 = arith.maximumf %86, %87 : vector<8x1024xf32>
    %89 = vector.broadcast %18 : f32 to vector<8x1024xf32>
    %90 = arith.mulf %88, %89 : vector<8x1024xf32>
    %91 = arith.addf %76, %90 : vector<8x1024xf32>
    %92 = vector.broadcast %19 : f32 to vector<8x1024xf32>
    %93 = arith.mulf %88, %92 : vector<8x1024xf32>
    %94 = arith.addf %79, %93 : vector<8x1024xf32>
    %cst_6 = arith.constant 0.000000e+00 : f32
    %95 = vector.broadcast %cst_6 : f32 to vector<8x1024xf32>
    %96 = arith.maximumf %91, %95 : vector<8x1024xf32>
    %cst_7 = arith.constant 0.000000e+00 : f32
    %97 = vector.broadcast %cst_7 : f32 to vector<8x1024xf32>
    %98 = arith.maximumf %94, %97 : vector<8x1024xf32>
    %99 = vector.broadcast %22 : f32 to vector<8x1024xf32>
    %100 = arith.mulf %96, %99 : vector<8x1024xf32>
    %101 = vector.broadcast %23 : f32 to vector<8x1024xf32>
    %102 = arith.mulf %98, %101 : vector<8x1024xf32>
    %103 = arith.addf %100, %102 : vector<8x1024xf32>
    %104 = vector.broadcast %24 : f32 to vector<8x1024xf32>
    %105 = arith.addf %103, %104 : vector<8x1024xf32>
    %106 = math.tanh %105 : vector<8x1024xf32>
    %cst_8 = arith.constant 5.000000e-01 : f32
    %107 = vector.broadcast %cst_8 : f32 to vector<8x1024xf32>
    %108 = arith.mulf %107, %106 : vector<8x1024xf32>
    %cst_9 = arith.constant 5.000000e-01 : f32
    %109 = vector.broadcast %cst_9 : f32 to vector<8x1024xf32>
    %110 = arith.addf %108, %109 : vector<8x1024xf32>
    %c0_10 = arith.constant 0 : index
    %111 = arith.index_cast %28 : i32 to index
    %c0_11 = arith.constant 0 : index
    %112 = vector.load %arg4[%c0_10, %111, %c0_11] : memref<1x8x1024xf32, #tpu.memory_space<vmem>>, vector<1x8x1024xf32>
    %113 = vector.shape_cast %112 : vector<1x8x1024xf32> to vector<8x1024xf32>
    %114 = vector.shape_cast %110 : vector<8x1024xf32> to vector<1x8x1024xf32>
    tpu.vector_store %arg4[%c0_10, %111, %c0_11], %114 {strides = array<i32>} : memref<1x8x1024xf32, #tpu.memory_space<vmem>>, vector<1x8x1024xf32>,
    %c1_i32_12 = arith.constant 1 : i32
    return
  }
  func.func @transform_0(%arg0: i32, %arg1: memref<25xf32, #tpu.memory_space<smem>>) -> (i32, i32) {
    %c0_i32 = arith.constant 0 : i32
    %c0_i32_0 = arith.constant 0 : i32
    return %arg0, %c0_i32 : i32, i32
  }
  func.func @transform_1(%arg0: i32, %arg1: memref<25xf32, #tpu.memory_space<smem>>) -> (i32, i32) {
    %c0_i32 = arith.constant 0 : i32
    %c0_i32_0 = arith.constant 0 : i32
    return %arg0, %c0_i32 : i32, i32
  }
  func.func @transform_2(%arg0: i32, %arg1: memref<25xf32, #tpu.memory_space<smem>>) -> (i32, i32, i32) {
    %c0_i32 = arith.constant 0 : i32
    %c0_i32_0 = arith.constant 0 : i32
    %c0_i32_1 = arith.constant 0 : i32
    return %c0_i32, %arg0, %c0_i32_0 : i32, i32, i32
  }
}

</mosaic_0001>

<llo_original>
// kernel: tpu_custom_call.1
$region0: #{tpu_custom_call.1}
  #allocation0 [shape = 'u32[]', space=smem, size = 0x4, offset = 0x4, fixed_abs, tag = 'smem constant byte address 0x4 - core index']
  #allocation1 [shape = 'u32[144,128]{1,0:T(1,128)}', space=vmem, size = 0x12000, scoped, tag = 'internal scratch']
  #allocation2 [shape = 's32[1]{0}', space=sflag, size = 0x4, scoped, tag = 'scoped memory for tpu_custom_call.1']
  #allocation3 [shape = 'u8[512]{0}', space=smem, size = 0x200, scoped, tag = 'prefetched SMEM operand 0']
  %s0 = inlined_call_operand.hbm [shape: f32[25], index: 0, kind: input, shape index: {}]
  %s1 = inlined_call_operand.hbm [shape: f32[8,1024], index: 1, kind: input, shape index: {}]
  %s2 = inlined_call_operand.hbm [shape: f32[8,1024], index: 2, kind: input, shape index: {}]
  %s3 = inlined_call_operand.hbm [shape: f32[1,8,1024], index: 3, kind: output, shape index: {}]
  %s4 = sld [smem:[#allocation0]]
  $region26: #{tpu_custom_call.1} parent=0
    _
  %s6 = ssub.s32 1, %s4
  %s7 = scalar_select 0, %s6, %s4
  %9 = dma.hbm_to_smem %s0, 16, [#allocation3], [#allocation2]
  %10 = dma.done [#allocation2], 16
  %11 = sfence
  $region1: #{tpu_custom_call.1} parent=0
    #allocation4 [shape = 'u8[32768]{0}', space=vmem, size = 0x8000, scoped, tag = 'input window, operand 1, single buffered']
    #allocation5 [shape = 's32[1]{0}', space=sflag, size = 0x4, scoped, tag = 'scoped memory for tpu_custom_call.1']
    #allocation6 [shape = 's32[1]{0}', space=sflag, size = 0x4, scoped, tag = 'scoped memory for tpu_custom_call.1']
    #allocation7 [shape = 'u8[32768]{0}', space=vmem, size = 0x8000, scoped, tag = 'input window, operand 2, single buffered']
    #allocation8 [shape = 's32[1]{0}', space=sflag, size = 0x4, scoped, tag = 'scoped memory for tpu_custom_call.1']
    #allocation9 [shape = 'u8[32768]{0}', space=vmem, size = 0x8000, scoped, tag = 'output window, operand 0, single buffered']
    %12 = vsyncpa [#allocation5], 0
    %13 = vsyncpa [#allocation8], 0
    %14 = vsyncpa [#allocation6], 0
    // Predicated region
    $region2: #{tpu_custom_call.1} parent=1 // pred_check
      _
    $region3: #{tpu_custom_call.1} parent=1 // pred_check_branch
      %16 = sbr.rel (0) target = $region5
    $region4: #{tpu_custom_call.1} parent=1 // pred_region
      %s18 = ssub.s32 1024, 1024
      %19 = vsyncadd [#allocation5], %s18
      %s21 = sshll.u32 [#allocation4], 4
      %s22 = int_to_ptr.vmem [resolvable:$true] %s21
      %24 = dma.hbm_to_vmem [thread:$0]  %s1, 1024, %s22, [#allocation5]
    $region5: #{tpu_custom_call.1} parent=1 // pred_fallthru
      _
    // Predicated region
    $region6: #{tpu_custom_call.1} parent=1 // pred_check
      _
    $region7: #{tpu_custom_call.1} parent=1 // pred_check_branch
      %26 = sbr.rel (0) target = $region9
    $region8: #{tpu_custom_call.1} parent=1 // pred_region
      %s28 = ssub.s32 1024, 1024
      %29 = vsyncadd [#allocation8], %s28
      %s31 = sshll.u32 [#allocation7], 4
      %s32 = int_to_ptr.vmem [resolvable:$true] %s31
      %34 = dma.hbm_to_vmem [thread:$0]  %s2, 1024, %s32, [#allocation8]
    $region9: #{tpu_custom_call.1} parent=1 // pred_fallthru
      _
    // Predicated region
    $region10: #{tpu_custom_call.1} parent=1 // pred_check
      _
    $region11: #{tpu_custom_call.1} parent=1 // pred_check_branch
      %36 = sbr.rel (0) target = $region13
    $region12: #{tpu_custom_call.1} parent=1 // pred_region
      %37 = dma.done [#allocation5], 1024
    $region13: #{tpu_custom_call.1} parent=1 // pred_fallthru
      _
    // Predicated region
    $region14: #{tpu_custom_call.1} parent=1 // pred_check
      _
    $region15: #{tpu_custom_call.1} parent=1 // pred_check_branch
      %39 = sbr.rel (0) target = $region17
    $region16: #{tpu_custom_call.1} parent=1 // pred_region
      %40 = dma.done [#allocation8], 1024
    $region17: #{tpu_custom_call.1} parent=1 // pred_fallthru
      _
    %s41 = sld [smem:[#allocation3]]
    %s42 = sld [smem:[#allocation3 + $0x1]]
    %s43 = sld [smem:[#allocation3 + $0x2]]
    %s44 = sld [smem:[#allocation3 + $0x3]]
    %s45 = sld [smem:[#allocation3 + $0x4]]
    %s46 = sld [smem:[#allocation3 + $0x5]]
    %s47 = sld [smem:[#allocation3 + $0x6]]
    %s48 = sld [smem:[#allocation3 + $0x7]]
    %s49 = sld [smem:[#allocation3 + $0x8]]
    %s50 = sld [smem:[#allocation3 + $0x9]]
    %s51 = sld [smem:[#allocation3 + $0xa]]
    %s52 = sld [smem:[#allocation3 + $0xb]]
    %s53 = sld [smem:[#allocation3 + $0xc]]
    %s54 = sld [smem:[#allocation3 + $0xd]]
    %s55 = sld [smem:[#allocation3 + $0xe]]
    %s56 = sld [smem:[#allocation3 + $0xf]]
    %s57 = sld [smem:[#allocation3 + $0x10]]
    %s58 = sld [smem:[#allocation3 + $0x11]]
    %s59 = sld [smem:[#allocation3 + $0x12]]
    %s60 = sld [smem:[#allocation3 + $0x13]]
    %s61 = sld [smem:[#allocation3 + $0x14]]
    %s62 = sld [smem:[#allocation3 + $0x15]]
    %s63 = sld [smem:[#allocation3 + $0x16]]
    %s64 = sld [smem:[#allocation3 + $0x17]]
    %s65 = sld [smem:[#allocation3 + $0x18]]
    %s66 = smul.u32 0, 8
    %s67 = smul.addr %s66, 8
    %s68 = scalar_lea.vmem [#allocation4], %s67
    %v69 = vld [vmem:[%s68] sm:$0xff]
    %v70 = vld [vmem:[%s68 + $0x8] sm:$0xff]
    %v71 = vld [vmem:[%s68 + $0x10] sm:$0xff]
    %v72 = vld [vmem:[%s68 + $0x18] sm:$0xff]
    %v73 = vld [vmem:[%s68 + $0x20] sm:$0xff]
    %v74 = vld [vmem:[%s68 + $0x28] sm:$0xff]
    %v75 = vld [vmem:[%s68 + $0x30] sm:$0xff]
    %v76 = vld [vmem:[%s68 + $0x38] sm:$0xff]
    %s77 = smul.addr %s66, 8
    %s78 = scalar_lea.vmem [#allocation7], %s77
    %v79 = vld [vmem:[%s78] sm:$0xff]
    %v80 = vld [vmem:[%s78 + $0x8] sm:$0xff]
    %v81 = vld [vmem:[%s78 + $0x10] sm:$0xff]
    %v82 = vld [vmem:[%s78 + $0x18] sm:$0xff]
    %v83 = vld [vmem:[%s78 + $0x20] sm:$0xff]
    %v84 = vld [vmem:[%s78 + $0x28] sm:$0xff]
    %v85 = vld [vmem:[%s78 + $0x30] sm:$0xff]
    %v86 = vld [vmem:[%s78 + $0x38] sm:$0xff]
    %v87 = vstv %s61
    %v88 = vstv %s62
    %v89 = vstv %s41
    %v90 = vmul.f32 %v69, %v89
    %v91 = vmul.f32 %v70, %v89
    %v92 = vmul.f32 %v71, %v89
    %v93 = vmul.f32 %v72, %v89
    %v94 = vmul.f32 %v73, %v89
    %v95 = vmul.f32 %v74, %v89
    %v96 = vmul.f32 %v75, %v89
    %v97 = vmul.f32 %v76, %v89
    %v98 = vstv %s45
    %v99 = vmul.f32 %v79, %v98
    %v100 = vmul.f32 %v80, %v98
    %v101 = vmul.f32 %v81, %v98
    %v102 = vmul.f32 %v82, %v98
    %v103 = vmul.f32 %v83, %v98
    %v104 = vmul.f32 %v84, %v98
    %v105 = vmul.f32 %v85, %v98
    %v106 = vmul.f32 %v86, %v98
    %v107 = vadd.f32 %v90, %v99
    %v108 = vadd.f32 %v91, %v100
    %v109 = vadd.f32 %v92, %v101
    %v110 = vadd.f32 %v93, %v102
    %v111 = vadd.f32 %v94, %v103
    %v112 = vadd.f32 %v95, %v104
    %v113 = vadd.f32 %v96, %v105
    %v114 = vadd.f32 %v97, %v106
    %v115 = vstv %s49
    %v116 = vadd.f32 %v107, %v115
    %v117 = vadd.f32 %v108, %v115
    %v118 = vadd.f32 %v109, %v115
    %v119 = vadd.f32 %v110, %v115
    %v120 = vadd.f32 %v111, %v115
    %v121 = vadd.f32 %v112, %v115
    %v122 = vadd.f32 %v113, %v115
    %v123 = vadd.f32 %v114, %v115
    %v124 = vmax.f32 %v116, 0.0
    %v125 = vmax.f32 %v117, 0.0
    %v126 = vmax.f32 %v118, 0.0
    %v127 = vmax.f32 %v119, 0.0
    %v128 = vmax.f32 %v120, 0.0
    %v129 = vmax.f32 %v121, 0.0
    %v130 = vmax.f32 %v122, 0.0
    %v131 = vmax.f32 %v123, 0.0
    %v132 = vstv %s53
    %v133 = vmul.f32 %v124, %v132
    %v134 = vmul.f32 %v125, %v132
    %v135 = vmul.f32 %v126, %v132
    %v136 = vmul.f32 %v127, %v132
    %v137 = vmul.f32 %v128, %v132
    %v138 = vmul.f32 %v129, %v132
    %v139 = vmul.f32 %v130, %v132
    %v140 = vmul.f32 %v131, %v132
    %v141 = vadd.f32 %v87, %v133
    %v142 = vadd.f32 %v87, %v134
    %v143 = vadd.f32 %v87, %v135
    %v144 = vadd.f32 %v87, %v136
    %v145 = vadd.f32 %v87, %v137
    %v146 = vadd.f32 %v87, %v138
    %v147 = vadd.f32 %v87, %v139
    %v148 = vadd.f32 %v87, %v140
    %v149 = vstv %s54
    %v150 = vmul.f32 %v124, %v149
    %v151 = vmul.f32 %v125, %v149
    %v152 = vmul.f32 %v126, %v149
    %v153 = vmul.f32 %v127, %v149
    %v154 = vmul.f32 %v128, %v149
    %v155 = vmul.f32 %v129, %v149
    %v156 = vmul.f32 %v130, %v149
    %v157 = vmul.f32 %v131, %v149
    %v158 = vadd.f32 %v88, %v150
    %v159 = vadd.f32 %v88, %v151
    %v160 = vadd.f32 %v88, %v152
    %v161 = vadd.f32 %v88, %v153
    %v162 = vadd.f32 %v88, %v154
    %v163 = vadd.f32 %v88, %v155
    %v164 = vadd.f32 %v88, %v156
    %v165 = vadd.f32 %v88, %v157
    %v166 = vstv %s42
    %v167 = vmul.f32 %v69, %v166
    %v168 = vmul.f32 %v70, %v166
    %v169 = vmul.f32 %v71, %v166
    %v170 = vmul.f32 %v72, %v166
    %v171 = vmul.f32 %v73, %v166
    %v172 = vmul.f32 %v74, %v166
    %v173 = vmul.f32 %v75, %v166
    %v174 = vmul.f32 %v76, %v166
    %v175 = vstv %s46
    %v176 = vmul.f32 %v79, %v175
    %v177 = vmul.f32 %v80, %v175
    %v178 = vmul.f32 %v81, %v175
    %v179 = vmul.f32 %v82, %v175
    %v180 = vmul.f32 %v83, %v175
    %v181 = vmul.f32 %v84, %v175
    %v182 = vmul.f32 %v85, %v175
    %v183 = vmul.f32 %v86, %v175
    %v184 = vadd.f32 %v167, %v176
    %v185 = vadd.f32 %v168, %v177
    %v186 = vadd.f32 %v169, %v178
    %v187 = vadd.f32 %v170, %v179
    %v188 = vadd.f32 %v171, %v180
    %v189 = vadd.f32 %v172, %v181
    %v190 = vadd.f32 %v173, %v182
    %v191 = vadd.f32 %v174, %v183
    %v192 = vstv %s50
    %v193 = vadd.f32 %v184, %v192
    %v194 = vadd.f32 %v185, %v192
    %v195 = vadd.f32 %v186, %v192
    %v196 = vadd.f32 %v187, %v192
    %v197 = vadd.f32 %v188, %v192
    %v198 = vadd.f32 %v189, %v192
    %v199 = vadd.f32 %v190, %v192
    %v200 = vadd.f32 %v191, %v192
    %v201 = vmax.f32 %v193, 0.0
    %v202 = vmax.f32 %v194, 0.0
    %v203 = vmax.f32 %v195, 0.0
    %v204 = vmax.f32 %v196, 0.0
    %v205 = vmax.f32 %v197, 0.0
    %v206 = vmax.f32 %v198, 0.0
    %v207 = vmax.f32 %v199, 0.0
    %v208 = vmax.f32 %v200, 0.0
    %v209 = vstv %s55
    %v210 = vmul.f32 %v201, %v209
    %v211 = vmul.f32 %v202, %v209
    %v212 = vmul.f32 %v203, %v209
    %v213 = vmul.f32 %v204, %v209
    %v214 = vmul.f32 %v205, %v209
    %v215 = vmul.f32 %v206, %v209
    %v216 = vmul.f32 %v207, %v209
    %v217 = vmul.f32 %v208, %v209
    %v218 = vadd.f32 %v141, %v210
    %v219 = vadd.f32 %v142, %v211
    %v220 = vadd.f32 %v143, %v212
    %v221 = vadd.f32 %v144, %v213
    %v222 = vadd.f32 %v145, %v214
    %v223 = vadd.f32 %v146, %v215
    %v224 = vadd.f32 %v147, %v216
    %v225 = vadd.f32 %v148, %v217
    %v226 = vstv %s56
    %v227 = vmul.f32 %v201, %v226
    %v228 = vmul.f32 %v202, %v226
    %v229 = vmul.f32 %v203, %v226
    %v230 = vmul.f32 %v204, %v226
    %v231 = vmul.f32 %v205, %v226
    %v232 = vmul.f32 %v206, %v226
    %v233 = vmul.f32 %v207, %v226
    %v234 = vmul.f32 %v208, %v226
    %v235 = vadd.f32 %v158, %v227
    %v236 = vadd.f32 %v159, %v228
    %v237 = vadd.f32 %v160, %v229
    %v238 = vadd.f32 %v161, %v230
    %v239 = vadd.f32 %v162, %v231
    %v240 = vadd.f32 %v163, %v232
    %v241 = vadd.f32 %v164, %v233
    %v242 = vadd.f32 %v165, %v234
    %v243 = vstv %s43
    %v244 = vmul.f32 %v69, %v243
    %v245 = vmul.f32 %v70, %v243
    %v246 = vmul.f32 %v71, %v243
    %v247 = vmul.f32 %v72, %v243
    %v248 = vmul.f32 %v73, %v243
    %v249 = vmul.f32 %v74, %v243
    %v250 = vmul.f32 %v75, %v243
    %v251 = vmul.f32 %v76, %v243
    %v252 = vstv %s47
    %v253 = vmul.f32 %v79, %v252
    %v254 = vmul.f32 %v80, %v252
    %v255 = vmul.f32 %v81, %v252
    %v256 = vmul.f32 %v82, %v252
    %v257 = vmul.f32 %v83, %v252
    %v258 = vmul.f32 %v84, %v252
    %v259 = vmul.f32 %v85, %v252
    %v260 = vmul.f32 %v86, %v252
    %v261 = vadd.f32 %v244, %v253
    %v262 = vadd.f32 %v245, %v254
    %v263 = vadd.f32 %v246, %v255
    %v264 = vadd.f32 %v247, %v256
    %v265 = vadd.f32 %v248, %v257
    %v266 = vadd.f32 %v249, %v258
    %v267 = vadd.f32 %v250, %v259
    %v268 = vadd.f32 %v251, %v260
    %v269 = vstv %s51
    %v270 = vadd.f32 %v261, %v269
    %v271 = vadd.f32 %v262, %v269
    %v272 = vadd.f32 %v263, %v269
    %v273 = vadd.f32 %v264, %v269
    %v274 = vadd.f32 %v265, %v269
    %v275 = vadd.f32 %v266, %v269
    %v276 = vadd.f32 %v267, %v269
    %v277 = vadd.f32 %v268, %v269
    %v278 = vmax.f32 %v270, 0.0
    %v279 = vmax.f32 %v271, 0.0
    %v280 = vmax.f32 %v272, 0.0
    %v281 = vmax.f32 %v273, 0.0
    %v282 = vmax.f32 %v274, 0.0
    %v283 = vmax.f32 %v275, 0.0
    %v284 = vmax.f32 %v276, 0.0
    %v285 = vmax.f32 %v277, 0.0
    %v286 = vstv %s57
    %v287 = vmul.f32 %v278, %v286
    %v288 = vmul.f32 %v279, %v286
    %v289 = vmul.f32 %v280, %v286
    %v290 = vmul.f32 %v281, %v286
    %v291 = vmul.f32 %v282, %v286
    %v292 = vmul.f32 %v283, %v286
    %v293 = vmul.f32 %v284, %v286
    %v294 = vmul.f32 %v285, %v286
    %v295 = vadd.f32 %v218, %v287
    %v296 = vadd.f32 %v219, %v288
    %v297 = vadd.f32 %v220, %v289
    %v298 = vadd.f32 %v221, %v290
    %v299 = vadd.f32 %v222, %v291
    %v300 = vadd.f32 %v223, %v292
    %v301 = vadd.f32 %v224, %v293
    %v302 = vadd.f32 %v225, %v294
    %v303 = vstv %s58
    %v304 = vmul.f32 %v278, %v303
    %v305 = vmul.f32 %v279, %v303
    %v306 = vmul.f32 %v280, %v303
    %v307 = vmul.f32 %v281, %v303
    %v308 = vmul.f32 %v282, %v303
    %v309 = vmul.f32 %v283, %v303
    %v310 = vmul.f32 %v284, %v303
    %v311 = vmul.f32 %v285, %v303
    %v312 = vadd.f32 %v235, %v304
    %v313 = vadd.f32 %v236, %v305
    %v314 = vadd.f32 %v237, %v306
    %v315 = vadd.f32 %v238, %v307
    %v316 = vadd.f32 %v239, %v308
    %v317 = vadd.f32 %v240, %v309
    %v318 = vadd.f32 %v241, %v310
    %v319 = vadd.f32 %v242, %v311
    %v320 = vstv %s44
    %v321 = vmul.f32 %v69, %v320
    %v322 = vmul.f32 %v70, %v320
    %v323 = vmul.f32 %v71, %v320
    %v324 = vmul.f32 %v72, %v320
    %v325 = vmul.f32 %v73, %v320
    %v326 = vmul.f32 %v74, %v320
    %v327 = vmul.f32 %v75, %v320
    %v328 = vmul.f32 %v76, %v320
    %v329 = vstv %s48
    %v330 = vmul.f32 %v79, %v329
    %v331 = vmul.f32 %v80, %v329
    %v332 = vmul.f32 %v81, %v329
    %v333 = vmul.f32 %v82, %v329
    %v334 = vmul.f32 %v83, %v329
    %v335 = vmul.f32 %v84, %v329
    %v336 = vmul.f32 %v85, %v329
    %v337 = vmul.f32 %v86, %v329
    %v338 = vadd.f32 %v321, %v330
    %v339 = vadd.f32 %v322, %v331
    %v340 = vadd.f32 %v323, %v332
    %v341 = vadd.f32 %v324, %v333
    %v342 = vadd.f32 %v325, %v334
    %v343 = vadd.f32 %v326, %v335
    %v344 = vadd.f32 %v327, %v336
    %v345 = vadd.f32 %v328, %v337
    %v346 = vstv %s52
    %v347 = vadd.f32 %v338, %v346
    %v348 = vadd.f32 %v339, %v346
    %v349 = vadd.f32 %v340, %v346
    %v350 = vadd.f32 %v341, %v346
    %v351 = vadd.f32 %v342, %v346
    %v352 = vadd.f32 %v343, %v346
    %v353 = vadd.f32 %v344, %v346
    %v354 = vadd.f32 %v345, %v346
    %v355 = vmax.f32 %v347, 0.0
    %v356 = vmax.f32 %v348, 0.0
    %v357 = vmax.f32 %v349, 0.0
    %v358 = vmax.f32 %v350, 0.0
    %v359 = vmax.f32 %v351, 0.0
    %v360 = vmax.f32 %v352, 0.0
    %v361 = vmax.f32 %v353, 0.0
    %v362 = vmax.f32 %v354, 0.0
    %v363 = vstv %s59
    %v364 = vmul.f32 %v355, %v363
    %v365 = vmul.f32 %v356, %v363
    %v366 = vmul.f32 %v357, %v363
    %v367 = vmul.f32 %v358, %v363
    %v368 = vmul.f32 %v359, %v363
    %v369 = vmul.f32 %v360, %v363
    %v370 = vmul.f32 %v361, %v363
    %v371 = vmul.f32 %v362, %v363
    %v372 = vadd.f32 %v295, %v364
    %v373 = vadd.f32 %v296, %v365
    %v374 = vadd.f32 %v297, %v366
    %v375 = vadd.f32 %v298, %v367
    %v376 = vadd.f32 %v299, %v368
    %v377 = vadd.f32 %v300, %v369
    %v378 = vadd.f32 %v301, %v370
    %v379 = vadd.f32 %v302, %v371
    %v380 = vstv %s60
    %v381 = vmul.f32 %v355, %v380
    %v382 = vmul.f32 %v356, %v380
    %v383 = vmul.f32 %v357, %v380
    %v384 = vmul.f32 %v358, %v380
    %v385 = vmul.f32 %v359, %v380
    %v386 = vmul.f32 %v360, %v380
    %v387 = vmul.f32 %v361, %v380
    %v388 = vmul.f32 %v362, %v380
    %v389 = vadd.f32 %v312, %v381
    %v390 = vadd.f32 %v313, %v382
    %v391 = vadd.f32 %v314, %v383
    %v392 = vadd.f32 %v315, %v384
    %v393 = vadd.f32 %v316, %v385
    %v394 = vadd.f32 %v317, %v386
    %v395 = vadd.f32 %v318, %v387
    %v396 = vadd.f32 %v319, %v388
    %v397 = vmax.f32 %v372, 0.0
    %v398 = vmax.f32 %v373, 0.0
    %v399 = vmax.f32 %v374, 0.0
    %v400 = vmax.f32 %v375, 0.0
    %v401 = vmax.f32 %v376, 0.0
    %v402 = vmax.f32 %v377, 0.0
    %v403 = vmax.f32 %v378, 0.0
    %v404 = vmax.f32 %v379, 0.0
    %v405 = vmax.f32 %v389, 0.0
    %v406 = vmax.f32 %v390, 0.0
    %v407 = vmax.f32 %v391, 0.0
    %v408 = vmax.f32 %v392, 0.0
    %v409 = vmax.f32 %v393, 0.0
    %v410 = vmax.f32 %v394, 0.0
    %v411 = vmax.f32 %v395, 0.0
    %v412 = vmax.f32 %v396, 0.0
    %v413 = vstv %s63
    %v414 = vmul.f32 %v397, %v413
    %v415 = vmul.f32 %v398, %v413
    %v416 = vmul.f32 %v399, %v413
    %v417 = vmul.f32 %v400, %v413
    %v418 = vmul.f32 %v401, %v413
    %v419 = vmul.f32 %v402, %v413
    %v420 = vmul.f32 %v403, %v413
    %v421 = vmul.f32 %v404, %v413
    %v422 = vstv %s64
    %v423 = vmul.f32 %v405, %v422
    %v424 = vmul.f32 %v406, %v422
    %v425 = vmul.f32 %v407, %v422
    %v426 = vmul.f32 %v408, %v422
    %v427 = vmul.f32 %v409, %v422
    %v428 = vmul.f32 %v410, %v422
    %v429 = vmul.f32 %v411, %v422
    %v430 = vmul.f32 %v412, %v422
    %v431 = vadd.f32 %v414, %v423
    %v432 = vadd.f32 %v415, %v424
    %v433 = vadd.f32 %v416, %v425
    %v434 = vadd.f32 %v417, %v426
    %v435 = vadd.f32 %v418, %v427
    %v436 = vadd.f32 %v419, %v428
    %v437 = vadd.f32 %v420, %v429
    %v438 = vadd.f32 %v421, %v430
    %v439 = vstv %s65
    %v440 = vadd.f32 %v431, %v439
    %v441 = vadd.f32 %v432, %v439
    %v442 = vadd.f32 %v433, %v439
    %v443 = vadd.f32 %v434, %v439
    %v444 = vadd.f32 %v435, %v439
    %v445 = vadd.f32 %v436, %v439
    %v446 = vadd.f32 %v437, %v439
    %v447 = vadd.f32 %v438, %v439
    %v448 = vtanh.pop %v440
    %v449 = vtanh.pop %v441
    %v450 = vtanh.pop %v442
    %v451 = vtanh.pop %v443
    %v452 = vtanh.pop %v444
    %v453 = vtanh.pop %v445
    %v454 = vtanh.pop %v446
    %v455 = vtanh.pop %v447
    %v456 = vmul.f32 %v448, 0.5
    %v457 = vmul.f32 %v449, 0.5
    %v458 = vmul.f32 %v450, 0.5
    %v459 = vmul.f32 %v451, 0.5
    %v460 = vmul.f32 %v452, 0.5
    %v461 = vmul.f32 %v453, 0.5
    %v462 = vmul.f32 %v454, 0.5
    %v463 = vmul.f32 %v455, 0.5
    %v464 = vadd.f32 %v456, 0.5
    %v465 = vadd.f32 %v457, 0.5
    %v466 = vadd.f32 %v458, 0.5
    %v467 = vadd.f32 %v459, 0.5
    %v468 = vadd.f32 %v460, 0.5
    %v469 = vadd.f32 %v461, 0.5
    %v470 = vadd.f32 %v462, 0.5
    %v471 = vadd.f32 %v463, 0.5
    %s472 = smul.addr %s66, 8
    %s473 = scalar_lea.vmem [#allocation9], %s472
    %474 = vst [vmem:[%s473] sm:$0xff] %v464
    %475 = vst [vmem:[%s473 + $0x8] sm:$0xff] %v465
    %476 = vst [vmem:[%s473 + $0x10] sm:$0xff] %v466
    %477 = vst [vmem:[%s473 + $0x18] sm:$0xff] %v467
    %478 = vst [vmem:[%s473 + $0x20] sm:$0xff] %v468
    %479 = vst [vmem:[%s473 + $0x28] sm:$0xff] %v469
    %480 = vst [vmem:[%s473 + $0x30] sm:$0xff] %v470
    %481 = vst [vmem:[%s473 + $0x38] sm:$0xff] %v471
    // Predicated region
    $region18: #{tpu_custom_call.1} parent=1 // pred_check
      _
    $region19: #{tpu_custom_call.1} parent=1 // pred_check_branch
      %483 = sbr.rel (0) target = $region21
    $region20: #{tpu_custom_call.1} parent=1 // pred_region
      %s485 = ssub.s32 1024, 1024
      %486 = vsyncadd [#allocation6], %s485
      %s488 = sshll.u32 [#allocation9], 4
      %s489 = int_to_ptr.vmem [resolvable:$true] %s488
      %491 = dma.vmem_to_hbm [thread:$0]  %s489, 1024, %s3, [#allocation6]
    $region21: #{tpu_custom_call.1} parent=1 // pred_fallthru
      _
    // Predicated region
    $region22: #{tpu_custom_call.1} parent=1 // pred_check
      _
    $region23: #{tpu_custom_call.1} parent=1 // pred_check_branch
      %493 = sbr.rel (0) target = $region25
    $region24: #{tpu_custom_call.1} parent=1 // pred_region
      %494 = dma.done [#allocation6], 1024
    $region25: #{tpu_custom_call.1} parent=1 // pred_fallthru
      _
    %495 = vsyncpa [#allocation5], 1
    %496 = vsyncpa [#allocation8], 1
    %497 = vsyncpa [#allocation6], 1

</llo_original>
